<compile_context>
chip_gen: v7x
topology: tpu7x:2x2x1
jax: 0.10.0
libtpu: 0.0.40
codegen_flags: <defaults>
</compile_context>

<pallas_src>
import functools

import jax
import jax.numpy as jnp
from jax.experimental import pallas as pl
from jax.experimental.pallas import tpu as pltpu


def _fu_kernel(xr_ref, xi_ref, wrr_ref, wri_ref, wir_ref, wii_ref,
               br_ref, bi_ref, yr_ref, yi_ref):
    """Blocks (leading batch dim squeezed out):
      xr/xi : (C_in, ts)   bf16  frequency-domain real / imag activations
      w??   : (tco, C_in)  bf16  BN-scale-folded 1x1-conv weight quadrants
      br/bi : (tco, 1)     f32   folded BatchNorm bias (re / im output channels)
      yr/yi : (tco, ts)    f32   post-ReLU real / imag outputs
    """
    xr = xr_ref[...]
    xi = xi_ref[...]

    yr = jnp.dot(wrr_ref[...], xr, preferred_element_type=jnp.float32)
    yr = yr + jnp.dot(wri_ref[...], xi, preferred_element_type=jnp.float32)
    yi = jnp.dot(wir_ref[...], xr, preferred_element_type=jnp.float32)
    yi = yi + jnp.dot(wii_ref[...], xi, preferred_element_type=jnp.float32)

    yr_ref[...] = jnp.maximum(yr + br_ref[...], 0.0).astype(yr_ref.dtype)
    yi_ref[...] = jnp.maximum(yi + bi_ref[...], 0.0).astype(yi_ref.dtype)


def _round_up(x, m):
    return ((x + m - 1) // m) * m


def _pick_tiles(c_in, c_out, spatial):
    """Choose (spatial_tile, c_out_tile) that fit the default scoped VMEM on all gens."""
    s_pad = max(128, _round_up(spatial, 128))

    # Tile the output-channel (sublane) axis only when it is large, so the resident
    # weight block stays small (important on v7x: 64 MiB VMEM, 2 TensorCores).
    if c_out > 256 and c_out % 256 == 0:
        tco = 256
    elif c_out > 256 and c_out % 128 == 0:
        tco = 128
    else:
        tco = c_out

    def vmem_bytes(ts_):
        x_b = 2 * 2 * c_in * ts_ * 2        # 2 bf16 inputs, double-buffered
        y_b = 2 * 2 * tco * ts_ * 4         # 2 f32 outputs, double-buffered
        w_b = 4 * 2 * tco * c_in * 2        # 4 bf16 weight quadrants
        b_b = 2 * 2 * tco * 128 * 4         # biases (lane-padded)
        return x_b + y_b + w_b + b_b

    for cand in (1024, 512, 256, 128):
        if cand <= s_pad and vmem_bytes(cand) <= 24 * 1024 * 1024:
            return cand, tco
    return 128, tco


def _freq_conv_bn_relu(xr, xi, w_rr, w_ri, w_ir, w_ii, bias_re, bias_im):
    """xr/xi: (B, C_in, S) bf16; w_??: (C_out, C_in) bf16; bias_*: (C_out, 1) f32.
    Returns (yr, yi): (B, C_out, S) f32 = ReLU(BN(conv1x1)) split into re/im channels."""
    b, c_in, s = xr.shape
    c_out = w_rr.shape[0]
    ts, tco = _pick_tiles(c_in, c_out, s)
    grid = (b, c_out // tco, pl.cdiv(s, ts))   # ragged last spatial block is masked

    x_spec = pl.BlockSpec((None, c_in, ts), lambda bi, ci, si: (bi, 0, si))
    w_spec = pl.BlockSpec((tco, c_in), lambda bi, ci, si: (ci, 0))
    b_spec = pl.BlockSpec((tco, 1), lambda bi, ci, si: (ci, 0))
    y_spec = pl.BlockSpec((None, tco, ts), lambda bi, ci, si: (bi, ci, si))

    yr, yi = pl.pallas_call(
        _fu_kernel,
        out_shape=(jax.ShapeDtypeStruct((b, c_out, s), jnp.float32),
                   jax.ShapeDtypeStruct((b, c_out, s), jnp.float32)),
        grid_spec=pltpu.PrefetchScalarGridSpec(
            num_scalar_prefetch=0,
            grid=grid,
            in_specs=[x_spec, x_spec, w_spec, w_spec, w_spec, w_spec,
                      b_spec, b_spec],
            out_specs=(y_spec, y_spec),
        ),
        compiler_params=pltpu.CompilerParams(
            dimension_semantics=("parallel", "parallel", "parallel")),
    )(xr, xi, w_rr, w_ri, w_ir, w_ii, bias_re, bias_im)
    return yr, yi


def fourier_unit_forward(x, conv_weight, bn_gamma, bn_beta, bn_mean, bn_var,
                         *, fft_norm="ortho", eps=1e-5):
    """x: (B, C, H, W) float32 (NCHW, matching PyTorch). Returns (B, C_out, H, W)."""
    b, c, h, w = x.shape
    c_out2 = conv_weight.shape[0]           # = 2 * out_channels
    c_out = c_out2 // 2

    # --- rfftn over (H, W), norm=fft_norm ---  (no Pallas FFT primitive)
    ffted = jnp.fft.rfftn(x.astype(jnp.float32), axes=(-2, -1), norm=fft_norm)
    wf = ffted.shape[-1]                    # W // 2 + 1
    s = h * wf

    # Channel-major layout (B, C, H*Wf); re/im kept as two separate streams so the
    # interleaved 2C-channel tensor is never materialized in HBM.
    xr = jnp.real(ffted).reshape(b, c, s).astype(jnp.bfloat16)
    xi = jnp.imag(ffted).reshape(b, c, s).astype(jnp.bfloat16)

    # Fold BatchNorm (inference mode) into the 1x1-conv weight and a per-channel bias.
    inv_std = jax.lax.rsqrt(bn_var.astype(jnp.float32) + eps)
    scale = bn_gamma.astype(jnp.float32) * inv_std
    bias = bn_beta.astype(jnp.float32) - bn_mean.astype(jnp.float32) * scale

    w_mat = conv_weight.reshape(c_out2, 2 * c).astype(jnp.float32) * scale[:, None]
    # PyTorch channel interleave is [c0_re, c0_im, c1_re, ...] on both conv input and
    # output; split the weight into re/im quadrants so the kernel works de-interleaved.
    w_rr = w_mat[0::2, 0::2].astype(jnp.bfloat16)   # real-out <- real-in
    w_ri = w_mat[0::2, 1::2].astype(jnp.bfloat16)   # real-out <- imag-in
    w_ir = w_mat[1::2, 0::2].astype(jnp.bfloat16)   # imag-out <- real-in
    w_ii = w_mat[1::2, 1::2].astype(jnp.bfloat16)   # imag-out <- imag-in
    bias_re = bias[0::2].reshape(c_out, 1)
    bias_im = bias[1::2].reshape(c_out, 1)

    yr, yi = _freq_conv_bn_relu(xr, xi, w_rr, w_ri, w_ir, w_ii, bias_re, bias_im)

    y_complex = jax.lax.complex(yr.reshape(b, c_out, h, wf),
                                yi.reshape(b, c_out, h, wf))

    # --- irfftn back to (H, W), norm=fft_norm ---
    out = jnp.fft.irfftn(y_complex, s=(h, w), axes=(-2, -1), norm=fft_norm)
    return out.astype(jnp.float32)


def _reference_forward(x, conv_weight, bn_gamma, bn_beta, bn_mean, bn_var,
                       *, fft_norm="ortho", eps=1e-5):
    """Pure-JAX reference mirroring the PyTorch interleaved formulation
    (operands rounded to bf16 like the kernel, f32 accumulation)."""
    b, c, h, w = x.shape
    c_out2 = conv_weight.shape[0]
    c_out = c_out2 // 2
    ff = jnp.fft.rfftn(x.astype(jnp.float32), axes=(-2, -1), norm=fft_norm)
    wf = ff.shape[-1]
    st = jnp.stack([jnp.real(ff), jnp.imag(ff)], axis=2).reshape(b, 2 * c, h, wf)
    inv_std = jax.lax.rsqrt(bn_var.astype(jnp.float32) + eps)
    scale = bn_gamma.astype(jnp.float32) * inv_std
    bias = bn_beta.astype(jnp.float32) - bn_mean.astype(jnp.float32) * scale
    w_mat = conv_weight.reshape(c_out2, 2 * c).astype(jnp.float32) * scale[:, None]
    y = jnp.einsum("oc,bchw->bohw",
                   w_mat.astype(jnp.bfloat16).astype(jnp.float32),
                   st.astype(jnp.bfloat16).astype(jnp.float32))
    y = jnp.maximum(y + bias[None, :, None, None], 0.0)
    y = y.reshape(b, c_out, 2, h, wf)
    yc = jax.lax.complex(y[:, :, 0], y[:, :, 1])
    return jnp.fft.irfftn(yc, s=(h, w), axes=(-2, -1), norm=fft_norm)


if __name__ == "__main__":
    # Small deterministic example consistent with the module.
    B, C, H, W = 2, 4, 16, 16
    C_OUT = C                              # in_channels == out_channels here

    key = jax.random.PRNGKey(0)
    k_x, k_w, k_g, k_b, k_m, k_v = jax.random.split(key, 6)

    x = jax.random.normal(k_x, (B, C, H, W), dtype=jnp.float32)

    # Conv2d(in=2C, out=2C_OUT, kernel_size=1, bias=False): weight (2C_OUT, 2C, 1, 1)
    conv_weight = (jax.random.normal(k_w, (2 * C_OUT, 2 * C, 1, 1), jnp.float32)
                   * (1.0 / jnp.sqrt(2.0 * C)))
    # BatchNorm2d(2*C_OUT) parameters / running stats (inference mode)
    bn_gamma = 1.0 + 0.1 * jax.random.normal(k_g, (2 * C_OUT,), jnp.float32)
    bn_beta = 0.1 * jax.random.normal(k_b, (2 * C_OUT,), jnp.float32)
    bn_mean = 0.1 * jax.random.normal(k_m, (2 * C_OUT,), jnp.float32)
    bn_var = jnp.abs(1.0 + 0.1 * jax.random.normal(k_v, (2 * C_OUT,), jnp.float32))

    fwd = jax.jit(functools.partial(fourier_unit_forward, fft_norm="ortho"))
    out = fwd(x, conv_weight, bn_gamma, bn_beta, bn_mean, bn_var)
    jax.block_until_ready(out)

    assert out.shape == (B, C_OUT, H, W), out.shape
    assert out.dtype == jnp.float32

    ref = _reference_forward(x, conv_weight, bn_gamma, bn_beta, bn_mean, bn_var)
    max_err = float(jnp.max(jnp.abs(out - ref)))
    assert max_err < 5e-2, f"max abs err vs reference: {max_err}"

    print("KERNEL_OK")
</pallas_src>

<mosaic_0001>
module attributes {stable_mosaic.version = 11 : i64} {
  func.func @_fu_kernel(%arg0: i32, %arg1: i32, %arg2: i32, %arg3: memref<1x4x256xbf16, #tpu.memory_space<vmem>>, %arg4: memref<1x4x256xbf16, #tpu.memory_space<vmem>>, %arg5: memref<4x4xbf16, #tpu.memory_space<vmem>>, %arg6: memref<4x4xbf16, #tpu.memory_space<vmem>>, %arg7: memref<4x4xbf16, #tpu.memory_space<vmem>>, %arg8: memref<4x4xbf16, #tpu.memory_space<vmem>>, %arg9: memref<4x1xf32, #tpu.memory_space<vmem>>, %arg10: memref<4x1xf32, #tpu.memory_space<vmem>>, %arg11: memref<1x4x256xf32, #tpu.memory_space<vmem>>, %arg12: memref<1x4x256xf32, #tpu.memory_space<vmem>>) attributes {dimension_semantics = [#tpu.dimension_semantics<parallel>, #tpu.dimension_semantics<parallel>, #tpu.dimension_semantics<parallel>], iteration_bounds = array<i64: 2, 1, 1>, scalar_prefetch = 0 : i64, scratch_operands = 0 : i64, tpu.core_type = #tpu.core_type<tc>, window_params = [{transform_indices = @transform_0, window_bounds = array<i64: 1, 4, 256>}, {transform_indices = @transform_1, window_bounds = array<i64: 1, 4, 256>}, {transform_indices = @transform_2, window_bounds = array<i64: 4, 4>}, {transform_indices = @transform_3, window_bounds = array<i64: 4, 4>}, {transform_indices = @transform_4, window_bounds = array<i64: 4, 4>}, {transform_indices = @transform_5, window_bounds = array<i64: 4, 4>}, {transform_indices = @transform_6, window_bounds = array<i64: 4, 1>}, {transform_indices = @transform_7, window_bounds = array<i64: 4, 1>}, {transform_indices = @transform_8, window_bounds = array<i64: 1, 4, 256>}, {transform_indices = @transform_9, window_bounds = array<i64: 1, 4, 256>}]} {
    %c0 = arith.constant 0 : index
    %c0_0 = arith.constant 0 : index
    %c0_1 = arith.constant 0 : index
    %0 = vector.load %arg3[%c0, %c0_0, %c0_1] : memref<1x4x256xbf16, #tpu.memory_space<vmem>>, vector<1x4x256xbf16>
    %1 = vector.shape_cast %0 : vector<1x4x256xbf16> to vector<4x256xbf16>
    %c0_2 = arith.constant 0 : index
    %c0_3 = arith.constant 0 : index
    %c0_4 = arith.constant 0 : index
    %2 = vector.load %arg4[%c0_2, %c0_3, %c0_4] : memref<1x4x256xbf16, #tpu.memory_space<vmem>>, vector<1x4x256xbf16>
    %3 = vector.shape_cast %2 : vector<1x4x256xbf16> to vector<4x256xbf16>
    %c0_5 = arith.constant 0 : index
    %c0_6 = arith.constant 0 : index
    %4 = vector.load %arg5[%c0_5, %c0_6] : memref<4x4xbf16, #tpu.memory_space<vmem>>, vector<4x4xbf16>
    %cst = arith.constant dense<0.000000e+00> : vector<4x256xf32>
    %5 = tpu.matmul %4, %1, %cst {dimension_numbers = #tpu.dot_dimension_numbers<[1], [0], [0], [1], [0, 0, 1, 1], [], []>} : vector<4x4xbf16>, vector<4x256xbf16>, vector<4x256xf32> -> vector<4x256xf32>
    %c0_7 = arith.constant 0 : index
    %c0_8 = arith.constant 0 : index
    %6 = vector.load %arg6[%c0_7, %c0_8] : memref<4x4xbf16, #tpu.memory_space<vmem>>, vector<4x4xbf16>
    %cst_9 = arith.constant dense<0.000000e+00> : vector<4x256xf32>
    %7 = tpu.matmul %6, %3, %cst_9 {dimension_numbers = #tpu.dot_dimension_numbers<[1], [0], [0], [1], [0, 0, 1, 1], [], []>} : vector<4x4xbf16>, vector<4x256xbf16>, vector<4x256xf32> -> vector<4x256xf32>
    %8 = arith.addf %5, %7 : vector<4x256xf32>
    %c0_10 = arith.constant 0 : index
    %c0_11 = arith.constant 0 : index
    %9 = vector.load %arg7[%c0_10, %c0_11] : memref<4x4xbf16, #tpu.memory_space<vmem>>, vector<4x4xbf16>
    %cst_12 = arith.constant dense<0.000000e+00> : vector<4x256xf32>
    %10 = tpu.matmul %9, %1, %cst_12 {dimension_numbers = #tpu.dot_dimension_numbers<[1], [0], [0], [1], [0, 0, 1, 1], [], []>} : vector<4x4xbf16>, vector<4x256xbf16>, vector<4x256xf32> -> vector<4x256xf32>
    %c0_13 = arith.constant 0 : index
    %c0_14 = arith.constant 0 : index
    %11 = vector.load %arg8[%c0_13, %c0_14] : memref<4x4xbf16, #tpu.memory_space<vmem>>, vector<4x4xbf16>
    %cst_15 = arith.constant dense<0.000000e+00> : vector<4x256xf32>
    %12 = tpu.matmul %11, %3, %cst_15 {dimension_numbers = #tpu.dot_dimension_numbers<[1], [0], [0], [1], [0, 0, 1, 1], [], []>} : vector<4x4xbf16>, vector<4x256xbf16>, vector<4x256xf32> -> vector<4x256xf32>
    %13 = arith.addf %10, %12 : vector<4x256xf32>
    %c0_16 = arith.constant 0 : index
    %c0_17 = arith.constant 0 : index
    %14 = vector.load %arg9[%c0_16, %c0_17] : memref<4x1xf32, #tpu.memory_space<vmem>>, vector<4x1xf32>
    %15 = vector.broadcast %14 : vector<4x1xf32> to vector<4x256xf32>
    %16 = arith.addf %8, %15 : vector<4x256xf32>
    %cst_18 = arith.constant 0.000000e+00 : f32
    %17 = vector.broadcast %cst_18 : f32 to vector<4x256xf32>
    %18 = arith.maximumf %16, %17 : vector<4x256xf32>
    %c0_19 = arith.constant 0 : index
    %c0_20 = arith.constant 0 : index
    %c0_21 = arith.constant 0 : index
    %19 = vector.load %arg11[%c0_19, %c0_20, %c0_21] : memref<1x4x256xf32, #tpu.memory_space<vmem>>, vector<1x4x256xf32>
    %20 = vector.shape_cast %19 : vector<1x4x256xf32> to vector<4x256xf32>
    %21 = vector.shape_cast %18 : vector<4x256xf32> to vector<1x4x256xf32>
    tpu.vector_store %arg11[%c0_19, %c0_20, %c0_21], %21 {strides = array<i32>} : memref<1x4x256xf32, #tpu.memory_space<vmem>>, vector<1x4x256xf32>,
    %c0_22 = arith.constant 0 : index
    %c0_23 = arith.constant 0 : index
    %22 = vector.load %arg10[%c0_22, %c0_23] : memref<4x1xf32, #tpu.memory_space<vmem>>, vector<4x1xf32>
    %23 = vector.broadcast %22 : vector<4x1xf32> to vector<4x256xf32>
    %24 = arith.addf %13, %23 : vector<4x256xf32>
    %cst_24 = arith.constant 0.000000e+00 : f32
    %25 = vector.broadcast %cst_24 : f32 to vector<4x256xf32>
    %26 = arith.maximumf %24, %25 : vector<4x256xf32>
    %c0_25 = arith.constant 0 : index
    %c0_26 = arith.constant 0 : index
    %c0_27 = arith.constant 0 : index
    %27 = vector.load %arg12[%c0_25, %c0_26, %c0_27] : memref<1x4x256xf32, #tpu.memory_space<vmem>>, vector<1x4x256xf32>
    %28 = vector.shape_cast %27 : vector<1x4x256xf32> to vector<4x256xf32>
    %29 = vector.shape_cast %26 : vector<4x256xf32> to vector<1x4x256xf32>
    tpu.vector_store %arg12[%c0_25, %c0_26, %c0_27], %29 {strides = array<i32>} : memref<1x4x256xf32, #tpu.memory_space<vmem>>, vector<1x4x256xf32>,
    return
  }
  func.func @transform_0(%arg0: i32, %arg1: i32, %arg2: i32) -> (i32, i32, i32) {
    %c0_i32 = arith.constant 0 : i32
    %c0_i32_0 = arith.constant 0 : i32
    return %arg0, %c0_i32, %arg2 : i32, i32, i32
  }
  func.func @transform_1(%arg0: i32, %arg1: i32, %arg2: i32) -> (i32, i32, i32) {
    %c0_i32 = arith.constant 0 : i32
    %c0_i32_0 = arith.constant 0 : i32
    return %arg0, %c0_i32, %arg2 : i32, i32, i32
  }
  func.func @transform_2(%arg0: i32, %arg1: i32, %arg2: i32) -> (i32, i32) {
    %c0_i32 = arith.constant 0 : i32
    %c0_i32_0 = arith.constant 0 : i32
    return %arg1, %c0_i32 : i32, i32
  }
  func.func @transform_3(%arg0: i32, %arg1: i32, %arg2: i32) -> (i32, i32) {
    %c0_i32 = arith.constant 0 : i32
    %c0_i32_0 = arith.constant 0 : i32
    return %arg1, %c0_i32 : i32, i32
  }
  func.func @transform_4(%arg0: i32, %arg1: i32, %arg2: i32) -> (i32, i32) {
    %c0_i32 = arith.constant 0 : i32
    %c0_i32_0 = arith.constant 0 : i32
    return %arg1, %c0_i32 : i32, i32
  }
  func.func @transform_5(%arg0: i32, %arg1: i32, %arg2: i32) -> (i32, i32) {
    %c0_i32 = arith.constant 0 : i32
    %c0_i32_0 = arith.constant 0 : i32
    return %arg1, %c0_i32 : i32, i32
  }
  func.func @transform_6(%arg0: i32, %arg1: i32, %arg2: i32) -> (i32, i32) {
    %c0_i32 = arith.constant 0 : i32
    %c0_i32_0 = arith.constant 0 : i32
    return %arg1, %c0_i32 : i32, i32
  }
  func.func @transform_7(%arg0: i32, %arg1: i32, %arg2: i32) -> (i32, i32) {
    %c0_i32 = arith.constant 0 : i32
    %c0_i32_0 = arith.constant 0 : i32
    return %arg1, %c0_i32 : i32, i32
  }
  func.func @transform_8(%arg0: i32, %arg1: i32, %arg2: i32) -> (i32, i32, i32) {
    %c0_i32 = arith.constant 0 : i32
    return %arg0, %arg1, %arg2 : i32, i32, i32
  }
  func.func @transform_9(%arg0: i32, %arg1: i32, %arg2: i32) -> (i32, i32, i32) {
    %c0_i32 = arith.constant 0 : i32
    return %arg0, %arg1, %arg2 : i32, i32, i32
  }
}

</mosaic_0001>

<llo_original>
// kernel: reverse.0
$region0: #{reverse.0}
  %s0 = inlined_call_operand.vmem [shape: f32[2,4,16,7], index: 0, kind: input, shape index: {}]
  %s1 = inlined_call_operand.vmem [shape: f32[2,4,16,7], index: 1, kind: output, shape index: {}]
  $region1: #{reverse.0} parent=0
    #allocation0 [shape = 'u8[65536]{0}', space=vmem, size = 0x10000, scoped, tag = 'operand span for operand 0']
    #allocation1 [shape = 'u8[32768]{0}', space=vmem, size = 0x8000, scoped, tag = 'operand span for operand 1']
    %s2 = scalar_lea.vmem [#allocation0], 8
    // Predicated region
    $region2: #{reverse.0} parent=1 // pred_check
      _
    $region3: #{reverse.0} parent=1 // pred_check_branch
      %4 = sbr.rel (0) target = $region5
    $region4: #{reverse.0} parent=1 // pred_region
      // Predicated region
      $region6: #{reverse.0} parent=4 // pred_check
        _
      $region7: #{reverse.0} parent=4 // pred_check_branch
        %6 = sbr.rel (0) target = $region9
      $region8: #{reverse.0} parent=4 // pred_region
        // Predicated region
        $region21: #{reverse.0} parent=8 // pred_check
          _
        $region22: #{reverse.0} parent=8 // pred_check_branch
          %35 = sbr.rel (0) target = $region24
        $region23: #{reverse.0} parent=8 // pred_region
          loop: start=0, step=1, limit=1
          $region25: #{reverse.0} parent=23 // loop_pre_header
            _
          $region26: #{reverse.0} parent=23 // loop_header
            %s37 = sphi 0, %s41
            %p38 = scmp.ge.s32.totalorder %s37, 1
            %s42 = sphi %s0, %s0
            %s43 = sphi %s2, %s2
          $region27: #{reverse.0} parent=23 // loop_header_branch
            %40 = sbr.rel (%p38) target = $region31
          $region28: #{reverse.0} parent=23 // loop_body
            %v44 = vld [vmem:[%s42] sm:$0xff]
            %45 = vst [vmem:[%s43] sm:$0xff] %v44
            %v46 = vld [vmem:[%s42 + $0x8] sm:$0xff]
            %47 = vst [vmem:[%s43 + $0x10] sm:$0xff] %v46
            %v48 = vld [vmem:[%s42 + $0x10] sm:$0xff]
            %49 = vst [vmem:[%s43 + $0x20] sm:$0xff] %v48
            %v50 = vld [vmem:[%s42 + $0x18] sm:$0xff]
            %51 = vst [vmem:[%s43 + $0x30] sm:$0xff] %v50
            %v52 = vld [vmem:[%s42 + $0x20] sm:$0xff]
            %53 = vst [vmem:[%s43 + $0x40] sm:$0xff] %v52
            %v54 = vld [vmem:[%s42 + $0x28] sm:$0xff]
            %55 = vst [vmem:[%s43 + $0x50] sm:$0xff] %v54
            %v56 = vld [vmem:[%s42 + $0x30] sm:$0xff]
            %57 = vst [vmem:[%s43 + $0x60] sm:$0xff] %v56
            %v58 = vld [vmem:[%s42 + $0x38] sm:$0xff]
            %59 = vst [vmem:[%s43 + $0x70] sm:$0xff] %v58
          $region29: #{reverse.0} parent=23 // loop_footer
            %s41 = sadd.s32 1, %s37
          $region30: #{reverse.0} parent=23 // loop_footer_branch
            %36 = sbr.rel target = $region26
          $region31: #{reverse.0} parent=23 // loop_exit
            _
        $region24: #{reverse.0} parent=8 // pred_fallthru
          _
        // Predicated region
        $region32: #{reverse.0} parent=8 // pred_check
          _
        $region33: #{reverse.0} parent=8 // pred_check_branch
          %61 = sbr.rel target = $region35
        $region34: #{reverse.0} parent=8 // pred_region
          _
        $region35: #{reverse.0} parent=8 // pred_fallthru
          _
      $region9: #{reverse.0} parent=4 // pred_fallthru
        _
      // Predicated region
      $region10: #{reverse.0} parent=4 // pred_check
        _
      $region11: #{reverse.0} parent=4 // pred_check_branch
        %8 = sbr.rel target = $region13
      $region12: #{reverse.0} parent=4 // pred_region
        loop: start=0, step=1, limit=1
        $region14: #{reverse.0} parent=12 // loop_pre_header
          _
        $region15: #{reverse.0} parent=12 // loop_header
          %s11 = sphi 0, %s15
          %p12 = scmp.ge.s32.totalorder %s11, 1
          %s16 = sphi %s0, %s0
          %s17 = sphi %s2, %s2
        $region16: #{reverse.0} parent=12 // loop_header_branch
          %14 = sbr.rel (%p12) target = $region20
        $region17: #{reverse.0} parent=12 // loop_body
          %v18 = vld [vmem:[%s16] sm:$0xff]
          %19 = vst [vmem:[%s17] sm:$0xff] %v18
          %v20 = vld [vmem:[%s16 + $0x8] sm:$0xff]
          %21 = vst [vmem:[%s17 + $0x10] sm:$0xff] %v20
          %v22 = vld [vmem:[%s16 + $0x10] sm:$0xff]
          %23 = vst [vmem:[%s17 + $0x20] sm:$0xff] %v22
          %v24 = vld [vmem:[%s16 + $0x18] sm:$0xff]
          %25 = vst [vmem:[%s17 + $0x30] sm:$0xff] %v24
          %v26 = vld [vmem:[%s16 + $0x20] sm:$0xff]
          %27 = vst [vmem:[%s17 + $0x40] sm:$0xff] %v26
          %v28 = vld [vmem:[%s16 + $0x28] sm:$0xff]
          %29 = vst [vmem:[%s17 + $0x50] sm:$0xff] %v28
          %v30 = vld [vmem:[%s16 + $0x30] sm:$0xff]
          %31 = vst [vmem:[%s17 + $0x60] sm:$0xff] %v30
          %v32 = vld [vmem:[%s16 + $0x38] sm:$0xff]
          %33 = vst [vmem:[%s17 + $0x70] sm:$0xff] %v32
        $region18: #{reverse.0} parent=12 // loop_footer
          %s15 = sadd.s32 1, %s11
        $region19: #{reverse.0} parent=12 // loop_footer_branch
          %10 = sbr.rel target = $region15
        $region20: #{reverse.0} parent=12 // loop_exit
          _
      $region13: #{reverse.0} parent=4 // pred_fallthru
        _
    $region5: #{reverse.0} parent=1 // pred_fallthru
      _
    %62 = vnop
    %s63 = scalar_lea.vmem [#allocation0], 7
    %v64 = vld [vmem:[%s63] ss:$-1 sm:$0xff]
    %v65 = vrot.slane %v64, 1
    %66 = vst [vmem:[#allocation1] sm:$0xff] %v65
    %s67 = scalar_lea.vmem [#allocation0], 8
    %s68 = scalar_lea.vmem %s67, 7 [#allocation0]
    %v69 = vld [vmem:[%s68] ss:$-1 sm:$0xff]
    %v70 = vrot.slane %v69, 1
    %v71 = vlaneseq
    %v72 = vshrl.u32 %v71, 7
    %vm73 = vcmp.lt.s32.totalorder %v72, 7
    %74 = vst.msk [vmem:[#allocation1] sm:$0xff] %vm73, %v70
    %s75 = scalar_lea.vmem [#allocation1], 8
    %s76 = scalar_lea.vmem [#allocation0], 16
    %s77 = scalar_lea.vmem %s76, 7 [#allocation0]
    %v78 = vld [vmem:[%s77] ss:$-1 sm:$0xff]
    %v79 = vrot.slane %v78, 1
    %80 = vst [vmem:[%s75] sm:$0xff] %v79
    %s81 = scalar_lea.vmem %s76, 8 [#allocation0]
    %s82 = scalar_lea.vmem %s81, 7 [#allocation0]
    %v83 = vld [vmem:[%s82] ss:$-1 sm:$0xff]
    %v84 = vrot.slane %v83, 1
    %v85 = vlaneseq
    %v86 = vshrl.u32 %v85, 7
    %vm87 = vcmp.lt.s32.totalorder %v86, 7
    %88 = vst.msk [vmem:[%s75] sm:$0xff] %vm87, %v84
    %s89 = scalar_lea.vmem [#allocation1], 16
    %s90 = scalar_lea.vmem [#allocation0], 32
    %s91 = scalar_lea.vmem %s90, 7 [#allocation0]
    %v92 = vld [vmem:[%s91] ss:$-1 sm:$0xff]
    %v93 = vrot.slane %v92, 1
    %94 = vst [vmem:[%s89] sm:$0xff] %v93
    %s95 = scalar_lea.vmem %s90, 8 [#allocation0]
    %s96 = scalar_lea.vmem %s95, 7 [#allocation0]
    %v97 = vld [vmem:[%s96] ss:$-1 sm:$0xff]
    %v98 = vrot.slane %v97, 1
    %v99 = vlaneseq
    %v100 = vshrl.u32 %v99, 7
    %vm101 = vcmp.lt.s32.totalorder %v100, 7
    %102 = vst.msk [vmem:[%s89] sm:$0xff] %vm101, %v98
    %s103 = scalar_lea.vmem [#allocation1], 24
    %s104 = scalar_lea.vmem [#allocation0], 48
    %s105 = scalar_lea.vmem %s104, 7 [#allocation0]
    %v106 = vld [vmem:[%s105] ss:$-1 sm:$0xff]
    %v107 = vrot.slane %v106, 1
    %108 = vst [vmem:[%s103] sm:$0xff] %v107
    %s109 = scalar_lea.vmem %s104, 8 [#allocation0]
    %s110 = scalar_lea.vmem %s109, 7 [#allocation0]
    %v111 = vld [vmem:[%s110] ss:$-1 sm:$0xff]
    %v112 = vrot.slane %v111, 1
    %v113 = vlaneseq
    %v114 = vshrl.u32 %v113, 7
    %vm115 = vcmp.lt.s32.totalorder %v114, 7
    %116 = vst.msk [vmem:[%s103] sm:$0xff] %vm115, %v112
    %s117 = scalar_lea.vmem [#allocation1], 32
    %s118 = scalar_lea.vmem [#allocation0], 64
    %s119 = scalar_lea.vmem %s118, 7 [#allocation0]
    %v120 = vld [vmem:[%s119] ss:$-1 sm:$0xff]
    %v121 = vrot.slane %v120, 1
    %122 = vst [vmem:[%s117] sm:$0xff] %v121
    %s123 = scalar_lea.vmem %s118, 8 [#allocation0]
    %s124 = scalar_lea.vmem %s123, 7 [#allocation0]
    %v125 = vld [vmem:[%s124] ss:$-1 sm:$0xff]
    %v126 = vrot.slane %v125, 1
    %v127 = vlaneseq
    %v128 = vshrl.u32 %v127, 7
    %vm129 = vcmp.lt.s32.totalorder %v128, 7
    %130 = vst.msk [vmem:[%s117] sm:$0xff] %vm129, %v126
    %s131 = scalar_lea.vmem [#allocation1], 40
    %s132 = scalar_lea.vmem [#allocation0], 80
    %s133 = scalar_lea.vmem %s132, 7 [#allocation0]
    %v134 = vld [vmem:[%s133] ss:$-1 sm:$0xff]
    %v135 = vrot.slane %v134, 1
    %136 = vst [vmem:[%s131] sm:$0xff] %v135
    %s137 = scalar_lea.vmem %s132, 8 [#allocation0]
    %s138 = scalar_lea.vmem %s137, 7 [#allocation0]
    %v139 = vld [vmem:[%s138] ss:$-1 sm:$0xff]
    %v140 = vrot.slane %v139, 1
    %v141 = vlaneseq
    %v142 = vshrl.u32 %v141, 7
    %vm143 = vcmp.lt.s32.totalorder %v142, 7
    %144 = vst.msk [vmem:[%s131] sm:$0xff] %vm143, %v140
    %s145 = scalar_lea.vmem [#allocation1], 48
    %s146 = scalar_lea.vmem [#allocation0], 96
    %s147 = scalar_lea.vmem %s146, 7 [#allocation0]
    %v148 = vld [vmem:[%s147] ss:$-1 sm:$0xff]
    %v149 = vrot.slane %v148, 1
    %150 = vst [vmem:[%s145] sm:$0xff] %v149
    %s151 = scalar_lea.vmem %s146, 8 [#allocation0]
    %s152 = scalar_lea.vmem %s151, 7 [#allocation0]
    %v153 = vld [vmem:[%s152] ss:$-1 sm:$0xff]
    %v154 = vrot.slane %v153, 1
    %v155 = vlaneseq
    %v156 = vshrl.u32 %v155, 7
    %vm157 = vcmp.lt.s32.totalorder %v156, 7
    %158 = vst.msk [vmem:[%s145] sm:$0xff] %vm157, %v154
    %s159 = scalar_lea.vmem [#allocation1], 56
    %s160 = scalar_lea.vmem [#allocation0], 112
    %s161 = scalar_lea.vmem %s160, 7 [#allocation0]
    %v162 = vld [vmem:[%s161] ss:$-1 sm:$0xff]
    %v163 = vrot.slane %v162, 1
    %164 = vst [vmem:[%s159] sm:$0xff] %v163
    %s165 = scalar_lea.vmem %s160, 8 [#allocation0]
    %s166 = scalar_lea.vmem %s165, 7 [#allocation0]
    %v167 = vld [vmem:[%s166] ss:$-1 sm:$0xff]
    %v168 = vrot.slane %v167, 1
    %v169 = vlaneseq
    %v170 = vshrl.u32 %v169, 7
    %vm171 = vcmp.lt.s32.totalorder %v170, 7
    %172 = vst.msk [vmem:[%s159] sm:$0xff] %vm171, %v168
    // Predicated region
    $region36: #{reverse.0} parent=1 // pred_check
      _
    $region37: #{reverse.0} parent=1 // pred_check_branch
      %174 = sbr.rel (0) target = $region39
    $region38: #{reverse.0} parent=1 // pred_region
      // Predicated region
      $region40: #{reverse.0} parent=38 // pred_check
        _
      $region41: #{reverse.0} parent=38 // pred_check_branch
        %176 = sbr.rel (0) target = $region43
      $region42: #{reverse.0} parent=38 // pred_region
        // Predicated region
        $region55: #{reverse.0} parent=42 // pred_check
          _
        $region56: #{reverse.0} parent=42 // pred_check_branch
          %205 = sbr.rel (0) target = $region58
        $region57: #{reverse.0} parent=42 // pred_region
          loop: start=0, step=1, limit=1
          $region59: #{reverse.0} parent=57 // loop_pre_header
            _
          $region60: #{reverse.0} parent=57 // loop_header
            %s207 = sphi 0, %s211
            %p208 = scmp.ge.s32.totalorder %s207, 1
            %s212 = sphi [#allocation1], [#allocation1]
            %s213 = sphi %s1, %s1
          $region61: #{reverse.0} parent=57 // loop_header_branch
            %210 = sbr.rel (%p208) target = $region65
          $region62: #{reverse.0} parent=57 // loop_body
            %v214 = vld [vmem:[%s212] sm:$0xff]
            %215 = vst [vmem:[%s213] sm:$0xff] %v214
            %v216 = vld [vmem:[%s212 + $0x8] sm:$0xff]
            %217 = vst [vmem:[%s213 + $0x8] sm:$0xff] %v216
            %v218 = vld [vmem:[%s212 + $0x10] sm:$0xff]
            %219 = vst [vmem:[%s213 + $0x10] sm:$0xff] %v218
            %v220 = vld [vmem:[%s212 + $0x18] sm:$0xff]
            %221 = vst [vmem:[%s213 + $0x18] sm:$0xff] %v220
            %v222 = vld [vmem:[%s212 + $0x20] sm:$0xff]
            %223 = vst [vmem:[%s213 + $0x20] sm:$0xff] %v222
            %v224 = vld [vmem:[%s212 + $0x28] sm:$0xff]
            %225 = vst [vmem:[%s213 + $0x28] sm:$0xff] %v224
            %v226 = vld [vmem:[%s212 + $0x30] sm:$0xff]
            %227 = vst [vmem:[%s213 + $0x30] sm:$0xff] %v226
            %v228 = vld [vmem:[%s212 + $0x38] sm:$0xff]
            %229 = vst [vmem:[%s213 + $0x38] sm:$0xff] %v228
          $region63: #{reverse.0} parent=57 // loop_footer
            %s211 = sadd.s32 1, %s207
          $region64: #{reverse.0} parent=57 // loop_footer_branch
            %206 = sbr.rel target = $region60
          $region65: #{reverse.0} parent=57 // loop_exit
            _
        $region58: #{reverse.0} parent=42 // pred_fallthru
          _
        // Predicated region
        $region66: #{reverse.0} parent=42 // pred_check
          _
        $region67: #{reverse.0} parent=42 // pred_check_branch
          %231 = sbr.rel target = $region69
        $region68: #{reverse.0} parent=42 // pred_region
          _
        $region69: #{reverse.0} parent=42 // pred_fallthru
          _
      $region43: #{reverse.0} parent=38 // pred_fallthru
        _
      // Predicated region
      $region44: #{reverse.0} parent=38 // pred_check
        _
      $region45: #{reverse.0} parent=38 // pred_check_branch
        %178 = sbr.rel target = $region47
      $region46: #{reverse.0} parent=38 // pred_region
        loop: start=0, step=1, limit=1
        $region48: #{reverse.0} parent=46 // loop_pre_header
          _
        $region49: #{reverse.0} parent=46 // loop_header
          %s181 = sphi 0, %s185
          %p182 = scmp.ge.s32.totalorder %s181, 1
          %s186 = sphi [#allocation1], [#allocation1]
          %s187 = sphi %s1, %s1
        $region50: #{reverse.0} parent=46 // loop_header_branch
          %184 = sbr.rel (%p182) target = $region54
        $region51: #{reverse.0} parent=46 // loop_body
          %v188 = vld [vmem:[%s186] sm:$0xff]
          %189 = vst [vmem:[%s187] sm:$0xff] %v188
          %v190 = vld [vmem:[%s186 + $0x8] sm:$0xff]
          %191 = vst [vmem:[%s187 + $0x8] sm:$0xff] %v190
          %v192 = vld [vmem:[%s186 + $0x10] sm:$0xff]
          %193 = vst [vmem:[%s187 + $0x10] sm:$0xff] %v192
          %v194 = vld [vmem:[%s186 + $0x18] sm:$0xff]
          %195 = vst [vmem:[%s187 + $0x18] sm:$0xff] %v194
          %v196 = vld [vmem:[%s186 + $0x20] sm:$0xff]
          %197 = vst [vmem:[%s187 + $0x20] sm:$0xff] %v196
          %v198 = vld [vmem:[%s186 + $0x28] sm:$0xff]
          %199 = vst [vmem:[%s187 + $0x28] sm:$0xff] %v198
          %v200 = vld [vmem:[%s186 + $0x30] sm:$0xff]
          %201 = vst [vmem:[%s187 + $0x30] sm:$0xff] %v200
          %v202 = vld [vmem:[%s186 + $0x38] sm:$0xff]
          %203 = vst [vmem:[%s187 + $0x38] sm:$0xff] %v202
        $region52: #{reverse.0} parent=46 // loop_footer
          %s185 = sadd.s32 1, %s181
        $region53: #{reverse.0} parent=46 // loop_footer_branch
          %180 = sbr.rel target = $region49
        $region54: #{reverse.0} parent=46 // loop_exit
          _
      $region47: #{reverse.0} parent=38 // pred_fallthru
        _
    $region39: #{reverse.0} parent=1 // pred_fallthru
      _
    %232 = vnop

// kernel: fourier_unit_forward.1
$region0: #{fourier_unit_forward.1}
  #allocation0 [shape = 'u32[]', space=smem, size = 0x4, offset = 0x4, fixed_abs, tag = 'smem constant byte address 0x4 - core index']
  #allocation1 [shape = 'u32[144,128]{1,0:T(1,128)}', space=vmem, size = 0x12000, scoped, tag = 'internal scratch']
  %s0 = inlined_call_operand.vmem [shape: bf16[2,4,144], index: 0, kind: input, shape index: {}]
  %s1 = inlined_call_operand.vmem [shape: bf16[2,4,144], index: 1, kind: input, shape index: {}]
  %s2 = inlined_call_operand.vmem [shape: bf16[4,4], index: 2, kind: input, shape index: {}]
  %s3 = inlined_call_operand.vmem [shape: bf16[4,4], index: 3, kind: input, shape index: {}]
  %s4 = inlined_call_operand.vmem [shape: bf16[4,4], index: 4, kind: input, shape index: {}]
  %s5 = inlined_call_operand.vmem [shape: bf16[4,4], index: 5, kind: input, shape index: {}]
  %s6 = inlined_call_operand.vmem [shape: f32[4,1], index: 6, kind: input, shape index: {}]
  %s7 = inlined_call_operand.vmem [shape: f32[4,1], index: 7, kind: input, shape index: {}]
  %s8 = inlined_call_operand.vmem [shape: f32[2,4,144], index: 8, kind: output, shape index: {0}]
  %s9 = inlined_call_operand.vmem [shape: f32[2,4,144], index: 9, kind: output, shape index: {1}]
  %10 = xla_tuple %s8, %s9
  %s11 = sld [smem:[#allocation0]]
  $region73: #{fourier_unit_forward.1} parent=0
    _
  %s13 = ssub.s32 1, %s11
  %s14 = scalar_select 0, %s13, %s11
  loop: start=0, step=1, limit=4
  $region2: #{fourier_unit_forward.1} parent=0 // loop_pre_header
    _
  $region3: #{fourier_unit_forward.1} parent=0 // loop_header
    %s16 = sphi 0, %s20
    %p17 = scmp.ge.s32.totalorder %s16, 4
    %s23 = sphi 0, %s42
    %s24 = sphi 0, %s38
    %s25 = sphi 0, %s34
    %s26 = sphi 0, %s23
    %s27 = sphi 0, %s24
    %s28 = sphi 0, %s25
    %s29 = sphi 0, %s26
    %s30 = sphi 0, %s27
    %s31 = sphi 0, %s28
    %s47 = sphi 0, %s49
    %s50 = sphi 0, %s47
    %s51 = sphi 0, %s50
    %s67 = sphi 0, %s51
    %s75 = sphi 0, %s77
    %s78 = sphi 0, %s75
    %s79 = sphi 0, %s78
    %s95 = sphi 0, %s79
    %s101 = sphi 0, %s103
    %s104 = sphi 0, %s101
    %s105 = sphi 0, %s104
    %s121 = sphi 0, %s105
    %s127 = sphi 0, %s129
    %s130 = sphi 0, %s127
    %s131 = sphi 0, %s130
    %s147 = sphi 0, %s131
    %s153 = sphi 0, %s155
    %s156 = sphi 0, %s153
    %s157 = sphi 0, %s156
    %s173 = sphi 0, %s157
    %s179 = sphi 0, %s181
    %s182 = sphi 0, %s179
    %s183 = sphi 0, %s182
    %s199 = sphi 0, %s183
    %s205 = sphi 0, %s207
    %s208 = sphi 0, %s205
    %s209 = sphi 0, %s208
    %s225 = sphi 0, %s209
    %s231 = sphi 0, %s233
    %s234 = sphi 0, %s231
    %s235 = sphi 0, %s234
    %s251 = sphi 0, %s235
    %s261 = sphi 0, %s263
    %s264 = sphi 0, %s261
    %s265 = sphi 0, %s264
    %s281 = sphi 0, %s265
    %s291 = sphi 0, %s293
    %s294 = sphi 0, %s291
    %s295 = sphi 0, %s294
    %s311 = sphi 0, %s295
  $region4: #{fourier_unit_forward.1} parent=0 // loop_header_branch
    %19 = sbr.rel (%p17) target = $region8
  $region5: #{fourier_unit_forward.1} parent=0 // loop_body
    %s21 = ssub.s32 %s16, 1
    %s22 = ssub.s32 %s16, 2
    %s32 = sadd.s32 1, %s25
    %p33 = scmp.ge.s32.totalorder %s32, 1
    %s34 = scalar_select %p33, 0, %s32
    %s35 = sadd.s32 1, %s24
    %s36 = scalar_select %p33, %s35, %s24
    %p37 = scmp.ge.s32.totalorder %s36, 1
    %s38 = scalar_select %p37, 0, %s36
    %s39 = sadd.s32 1, %s23
    %s40 = scalar_select %p37, %s39, %s23
    %p41 = scmp.ge.s32.totalorder %s40, 2
    %s42 = scalar_select %p41, 0, %s40
    %s43 = ssub.s32 %s23, %s42
    %s44 = ssub.s32 %s25, %s34
    %s45 = sor.u32 %s43, %s44
    %p46 = scmp.eq.s32.totalorder %s45, 0
    %s48 = sadd.s32 %s47, 1
    %s49 = scalar_select %p46, %s47, %s48
    %p52 = pneg %p46
    %p53 = scmp.eq.s32.totalorder %s16, 1
    %p54 = por %p52, %p53
    %p55 = scmp.ne.s32.totalorder %s47, %s50
    %p56 = scmp.eq.s32.totalorder %s16, 0
    %p57 = por %p55, %p56
    %p58 = scmp.ne.s32.totalorder %s47, %s50
    %p59 = scmp.eq.s32.totalorder %s21, 1
    %p60 = por %p58, %p59
    %p61 = scmp.ne.s32.totalorder %s50, %s51
    %p62 = scmp.eq.s32.totalorder %s21, 0
    %p63 = por %p61, %p62
    %p64 = scmp.ne.s32.totalorder %s50, %s51
    %p65 = scmp.eq.s32.totalorder %s22, 1
    %p66 = por %p64, %p65
    %p68 = scmp.ne.s32.totalorder %s51, %s67
    %p69 = scmp.eq.s32.totalorder %s22, 0
    %p70 = por %p68, %p69
    %s71 = ssub.s32 %s23, %s42
    %s72 = ssub.s32 %s25, %s34
    %s73 = sor.u32 %s71, %s72
    %p74 = scmp.eq.s32.totalorder %s73, 0
    %s76 = sadd.s32 %s75, 1
    %s77 = scalar_select %p74, %s75, %s76
    %p80 = pneg %p74
    %p81 = scmp.eq.s32.totalorder %s16, 1
    %p82 = por %p80, %p81
    %p83 = scmp.ne.s32.totalorder %s75, %s78
    %p84 = scmp.eq.s32.totalorder %s16, 0
    %p85 = por %p83, %p84
    %p86 = scmp.ne.s32.totalorder %s75, %s78
    %p87 = scmp.eq.s32.totalorder %s21, 1
    %p88 = por %p86, %p87
    %p89 = scmp.ne.s32.totalorder %s78, %s79
    %p90 = scmp.eq.s32.totalorder %s21, 0
    %p91 = por %p89, %p90
    %p92 = scmp.ne.s32.totalorder %s78, %s79
    %p93 = scmp.eq.s32.totalorder %s22, 1
    %p94 = por %p92, %p93
    %p96 = scmp.ne.s32.totalorder %s79, %s95
    %p97 = scmp.eq.s32.totalorder %s22, 0
    %p98 = por %p96, %p97
    %s99 = ssub.s32 %s24, %s38
    %p100 = scmp.eq.s32.totalorder %s99, 0
    %s102 = sadd.s32 %s101, 1
    %s103 = scalar_select %p100, %s101, %s102
    %p106 = pneg %p100
    %p107 = scmp.eq.s32.totalorder %s16, 1
    %p108 = por %p106, %p107
    %p109 = scmp.ne.s32.totalorder %s101, %s104
    %p110 = scmp.eq.s32.totalorder %s16, 0
    %p111 = por %p109, %p110
    %p112 = scmp.ne.s32.totalorder %s101, %s104
    %p113 = scmp.eq.s32.totalorder %s21, 1
    %p114 = por %p112, %p113
    %p115 = scmp.ne.s32.totalorder %s104, %s105
    %p116 = scmp.eq.s32.totalorder %s21, 0
    %p117 = por %p115, %p116
    %p118 = scmp.ne.s32.totalorder %s104, %s105
    %p119 = scmp.eq.s32.totalorder %s22, 1
    %p120 = por %p118, %p119
    %p122 = scmp.ne.s32.totalorder %s105, %s121
    %p123 = scmp.eq.s32.totalorder %s22, 0
    %p124 = por %p122, %p123
    %s125 = ssub.s32 %s24, %s38
    %p126 = scmp.eq.s32.totalorder %s125, 0
    %s128 = sadd.s32 %s127, 1
    %s129 = scalar_select %p126, %s127, %s128
    %p132 = pneg %p126
    %p133 = scmp.eq.s32.totalorder %s16, 1
    %p134 = por %p132, %p133
    %p135 = scmp.ne.s32.totalorder %s127, %s130
    %p136 = scmp.eq.s32.totalorder %s16, 0
    %p137 = por %p135, %p136
    %p138 = scmp.ne.s32.totalorder %s127, %s130
    %p139 = scmp.eq.s32.totalorder %s21, 1
    %p140 = por %p138, %p139
    %p141 = scmp.ne.s32.totalorder %s130, %s131
    %p142 = scmp.eq.s32.totalorder %s21, 0
    %p143 = por %p141, %p142
    %p144 = scmp.ne.s32.totalorder %s130, %s131
    %p145 = scmp.eq.s32.totalorder %s22, 1
    %p146 = por %p144, %p145
    %p148 = scmp.ne.s32.totalorder %s131, %s147
    %p149 = scmp.eq.s32.totalorder %s22, 0
    %p150 = por %p148, %p149
    %s151 = ssub.s32 %s24, %s38
    %p152 = scmp.eq.s32.totalorder %s151, 0
    %s154 = sadd.s32 %s153, 1
    %s155 = scalar_select %p152, %s153, %s154
    %p158 = pneg %p152
    %p159 = scmp.eq.s32.totalorder %s16, 1
    %p160 = por %p158, %p159
    %p161 = scmp.ne.s32.totalorder %s153, %s156
    %p162 = scmp.eq.s32.totalorder %s16, 0
    %p163 = por %p161, %p162
    %p164 = scmp.ne.s32.totalorder %s153, %s156
    %p165 = scmp.eq.s32.totalorder %s21, 1
    %p166 = por %p164, %p165
    %p167 = scmp.ne.s32.totalorder %s156, %s157
    %p168 = scmp.eq.s32.totalorder %s21, 0
    %p169 = por %p167, %p168
    %p170 = scmp.ne.s32.totalorder %s156, %s157
    %p171 = scmp.eq.s32.totalorder %s22, 1
    %p172 = por %p170, %p171
    %p174 = scmp.ne.s32.totalorder %s157, %s173
    %p175 = scmp.eq.s32.totalorder %s22, 0
    %p176 = por %p174, %p175
    %s177 = ssub.s32 %s24, %s38
    %p178 = scmp.eq.s32.totalorder %s177, 0
    %s180 = sadd.s32 %s179, 1
    %s181 = scalar_select %p178, %s179, %s180
    %p184 = pneg %p178
    %p185 = scmp.eq.s32.totalorder %s16, 1
    %p186 = por %p184, %p185
    %p187 = scmp.ne.s32.totalorder %s179, %s182
    %p188 = scmp.eq.s32.totalorder %s16, 0
    %p189 = por %p187, %p188
    %p190 = scmp.ne.s32.totalorder %s179, %s182
    %p191 = scmp.eq.s32.totalorder %s21, 1
    %p192 = por %p190, %p191
    %p193 = scmp.ne.s32.totalorder %s182, %s183
    %p194 = scmp.eq.s32.totalorder %s21, 0
    %p195 = por %p193, %p194
    %p196 = scmp.ne.s32.totalorder %s182, %s183
    %p197 = scmp.eq.s32.totalorder %s22, 1
    %p198 = por %p196, %p197
    %p200 = scmp.ne.s32.totalorder %s183, %s199
    %p201 = scmp.eq.s32.totalorder %s22, 0
    %p202 = por %p200, %p201
    %s203 = ssub.s32 %s24, %s38
    %p204 = scmp.eq.s32.totalorder %s203, 0
    %s206 = sadd.s32 %s205, 1
    %s207 = scalar_select %p204, %s205, %s206
    %p210 = pneg %p204
    %p211 = scmp.eq.s32.totalorder %s16, 1
    %p212 = por %p210, %p211
    %p213 = scmp.ne.s32.totalorder %s205, %s208
    %p214 = scmp.eq.s32.totalorder %s16, 0
    %p215 = por %p213, %p214
    %p216 = scmp.ne.s32.totalorder %s205, %s208
    %p217 = scmp.eq.s32.totalorder %s21, 1
    %p218 = por %p216, %p217
    %p219 = scmp.ne.s32.totalorder %s208, %s209
    %p220 = scmp.eq.s32.totalorder %s21, 0
    %p221 = por %p219, %p220
    %p222 = scmp.ne.s32.totalorder %s208, %s209
    %p223 = scmp.eq.s32.totalorder %s22, 1
    %p224 = por %p222, %p223
    %p226 = scmp.ne.s32.totalorder %s209, %s225
    %p227 = scmp.eq.s32.totalorder %s22, 0
    %p228 = por %p226, %p227
    %s229 = ssub.s32 %s24, %s38
    %p230 = scmp.eq.s32.totalorder %s229, 0
    %s232 = sadd.s32 %s231, 1
    %s233 = scalar_select %p230, %s231, %s232
    %p236 = pneg %p230
    %p237 = scmp.eq.s32.totalorder %s16, 1
    %p238 = por %p236, %p237
    %p239 = scmp.ne.s32.totalorder %s231, %s234
    %p240 = scmp.eq.s32.totalorder %s16, 0
    %p241 = por %p239, %p240
    %p242 = scmp.ne.s32.totalorder %s231, %s234
    %p243 = scmp.eq.s32.totalorder %s21, 1
    %p244 = por %p242, %p243
    %p245 = scmp.ne.s32.totalorder %s234, %s235
    %p246 = scmp.eq.s32.totalorder %s21, 0
    %p247 = por %p245, %p246
    %p248 = scmp.ne.s32.totalorder %s234, %s235
    %p249 = scmp.eq.s32.totalorder %s22, 1
    %p250 = por %p248, %p249
    %p252 = scmp.ne.s32.totalorder %s235, %s251
    %p253 = scmp.eq.s32.totalorder %s22, 0
    %p254 = por %p252, %p253
    %s255 = ssub.s32 %s23, %s42
    %s256 = ssub.s32 %s24, %s38
    %s257 = sor.u32 %s255, %s256
    %s258 = ssub.s32 %s25, %s34
    %s259 = sor.u32 %s257, %s258
    %p260 = scmp.eq.s32.totalorder %s259, 0
    %s262 = sadd.s32 %s261, 1
    %s263 = scalar_select %p260, %s261, %s262
    %p266 = pneg %p260
    %p267 = scmp.eq.s32.totalorder %s16, 1
    %p268 = por %p266, %p267
    %p269 = scmp.ne.s32.totalorder %s261, %s264
    %p270 = scmp.eq.s32.totalorder %s16, 0
    %p271 = por %p269, %p270
    %p272 = scmp.ne.s32.totalorder %s261, %s264
    %p273 = scmp.eq.s32.totalorder %s21, 1
    %p274 = por %p272, %p273
    %p275 = scmp.ne.s32.totalorder %s264, %s265
    %p276 = scmp.eq.s32.totalorder %s21, 0
    %p277 = por %p275, %p276
    %p278 = scmp.ne.s32.totalorder %s264, %s265
    %p279 = scmp.eq.s32.totalorder %s22, 1
    %p280 = por %p278, %p279
    %p282 = scmp.ne.s32.totalorder %s265, %s281
    %p283 = scmp.eq.s32.totalorder %s22, 0
    %p284 = por %p282, %p283
    %s285 = ssub.s32 %s23, %s42
    %s286 = ssub.s32 %s24, %s38
    %s287 = sor.u32 %s285, %s286
    %s288 = ssub.s32 %s25, %s34
    %s289 = sor.u32 %s287, %s288
    %p290 = scmp.eq.s32.totalorder %s289, 0
    %s292 = sadd.s32 %s291, 1
    %s293 = scalar_select %p290, %s291, %s292
    %p296 = pneg %p290
    %p297 = scmp.eq.s32.totalorder %s16, 1
    %p298 = por %p296, %p297
    %p299 = scmp.ne.s32.totalorder %s291, %s294
    %p300 = scmp.eq.s32.totalorder %s16, 0
    %p301 = por %p299, %p300
    %p302 = scmp.ne.s32.totalorder %s291, %s294
    %p303 = scmp.eq.s32.totalorder %s21, 1
    %p304 = por %p302, %p303
    %p305 = scmp.ne.s32.totalorder %s294, %s295
    %p306 = scmp.eq.s32.totalorder %s21, 0
    %p307 = por %p305, %p306
    %p308 = scmp.ne.s32.totalorder %s294, %s295
    %p309 = scmp.eq.s32.totalorder %s22, 1
    %p310 = por %p308, %p309
    %p312 = scmp.ne.s32.totalorder %s295, %s311
    %p313 = scmp.eq.s32.totalorder %s22, 0
    %p314 = por %p312, %p313
    %p315 = scmp.le.s32.totalorder 1, %s16
    %p316 = scmp.lt.s32.totalorder %s16, 3
    %p317 = pnand %p315, %p316
    %p318 = pneg %p317
    // Predicated region
    $region9: #{fourier_unit_forward.1} parent=5 // pred_check
      _
    $region10: #{fourier_unit_forward.1} parent=5 // pred_check_branch
      %320 = sbr.rel (%p317) target = $region12
    $region11: #{fourier_unit_forward.1} parent=5 // pred_region
      %s321 = ssub.s32 %s16, 1
      // Predicated region
      $region13: #{fourier_unit_forward.1} parent=11 // pred_check
        %p322 = pneg %p117
      $region14: #{fourier_unit_forward.1} parent=11 // pred_check_branch
        %324 = sbr.rel (%p322) target = $region16
      $region15: #{fourier_unit_forward.1} parent=11 // pred_region
        %p325 = scmp.lt.s32.totalorder %s27, 0
        %s326 = scalar_select %p325, %s27, 0
        %s327 = smul.addr %s326, 2
        %s328 = scalar_lea.vmem %s2, %s327
      $region16: #{fourier_unit_forward.1} parent=11 // pred_fallthru
        _
      // Predicated region
      $region17: #{fourier_unit_forward.1} parent=11 // pred_check
        %p329 = pneg %p143
      $region18: #{fourier_unit_forward.1} parent=11 // pred_check_branch
        %331 = sbr.rel (%p329) target = $region20
      $region19: #{fourier_unit_forward.1} parent=11 // pred_region
        %p332 = scmp.lt.s32.totalorder %s27, 0
        %s333 = scalar_select %p332, %s27, 0
        %s334 = smul.addr %s333, 2
        %s335 = scalar_lea.vmem %s3, %s334
      $region20: #{fourier_unit_forward.1} parent=11 // pred_fallthru
        _
      // Predicated region
      $region21: #{fourier_unit_forward.1} parent=11 // pred_check
        %p336 = pneg %p169
      $region22: #{fourier_unit_forward.1} parent=11 // pred_check_branch
        %338 = sbr.rel (%p336) target = $region24
      $region23: #{fourier_unit_forward.1} parent=11 // pred_region
        %p339 = scmp.lt.s32.totalorder %s27, 0
        %s340 = scalar_select %p339, %s27, 0
        %s341 = smul.addr %s340, 2
        %s342 = scalar_lea.vmem %s4, %s341
      $region24: #{fourier_unit_forward.1} parent=11 // pred_fallthru
        _
      // Predicated region
      $region25: #{fourier_unit_forward.1} parent=11 // pred_check
        %p343 = pneg %p195
      $region26: #{fourier_unit_forward.1} parent=11 // pred_check_branch
        %345 = sbr.rel (%p343) target = $region28
      $region27: #{fourier_unit_forward.1} parent=11 // pred_region
        %p346 = scmp.lt.s32.totalorder %s27, 0
        %s347 = scalar_select %p346, %s27, 0
        %s348 = smul.addr %s347, 2
        %s349 = scalar_lea.vmem %s5, %s348
      $region28: #{fourier_unit_forward.1} parent=11 // pred_fallthru
        _
      // Predicated region
      $region29: #{fourier_unit_forward.1} parent=11 // pred_check
        %p350 = pneg %p221
      $region30: #{fourier_unit_forward.1} parent=11 // pred_check_branch
        %352 = sbr.rel (%p350) target = $region32
      $region31: #{fourier_unit_forward.1} parent=11 // pred_region
        %p353 = scmp.lt.s32.totalorder %s27, 0
        %s354 = scalar_select %p353, %s27, 0
        %s355 = smul.addr %s354, 4
        %s356 = scalar_lea.vmem %s6, %s355
      $region32: #{fourier_unit_forward.1} parent=11 // pred_fallthru
        _
      // Predicated region
      $region33: #{fourier_unit_forward.1} parent=11 // pred_check
        %p357 = pneg %p247
      $region34: #{fourier_unit_forward.1} parent=11 // pred_check_branch
        %359 = sbr.rel (%p357) target = $region36
      $region35: #{fourier_unit_forward.1} parent=11 // pred_region
        %p360 = scmp.lt.s32.totalorder %s27, 0
        %s361 = scalar_select %p360, %s27, 0
        %s362 = smul.addr %s361, 4
        %s363 = scalar_lea.vmem %s7, %s362
      $region36: #{fourier_unit_forward.1} parent=11 // pred_fallthru
        _
    $region12: #{fourier_unit_forward.1} parent=5 // pred_fallthru
      _
    %p364 = scmp.lt.s32.totalorder %s16, 2
    // Predicated region
    $region37: #{fourier_unit_forward.1} parent=5 // pred_check
      %p365 = pneg %p364
    $region38: #{fourier_unit_forward.1} parent=5 // pred_check_branch
      %367 = sbr.rel (%p365) target = $region40
    $region39: #{fourier_unit_forward.1} parent=5 // pred_region
      // Predicated region
      $region41: #{fourier_unit_forward.1} parent=39 // pred_check
        %p368 = pneg %p57
      $region42: #{fourier_unit_forward.1} parent=39 // pred_check_branch
        %370 = sbr.rel (%p368) target = $region44
      $region43: #{fourier_unit_forward.1} parent=39 // pred_region
        %s371 = smul.u32 2, %s25
        %p372 = scmp.lt.s32.totalorder %s23, 1
        %s373 = scalar_select %p372, %s23, 1
        %p374 = scmp.lt.s32.totalorder %s371, 1
        %s375 = scalar_select %p374, %s371, 1
        %s376 = smul.addr %s373, 2
        %s377 = sadd.s32 %s375, %s376
        %s378 = smul.addr %s377, 2
        %s379 = scalar_lea.vmem %s0, %s378
        %s380 = smul.u32 2, %s25
      $region44: #{fourier_unit_forward.1} parent=39 // pred_fallthru
        _
      // Predicated region
      $region45: #{fourier_unit_forward.1} parent=39 // pred_check
        %p381 = pneg %p85
      $region46: #{fourier_unit_forward.1} parent=39 // pred_check_branch
        %383 = sbr.rel (%p381) target = $region48
      $region47: #{fourier_unit_forward.1} parent=39 // pred_region
        %s384 = smul.u32 2, %s25
        %p385 = scmp.lt.s32.totalorder %s23, 1
        %s386 = scalar_select %p385, %s23, 1
        %p387 = scmp.lt.s32.totalorder %s384, 1
        %s388 = scalar_select %p387, %s384, 1
        %s389 = smul.addr %s386, 2
        %s390 = sadd.s32 %s388, %s389
        %s391 = smul.addr %s390, 2
        %s392 = scalar_lea.vmem %s1, %s391
        %s393 = smul.u32 2, %s25
      $region48: #{fourier_unit_forward.1} parent=39 // pred_fallthru
        _
    $region40: #{fourier_unit_forward.1} parent=5 // pred_fallthru
      _
    %p394 = scmp.le.s32.totalorder 1, %s16
    %p395 = scmp.lt.s32.totalorder %s16, 3
    %p396 = pnand %p394, %p395
    %p397 = pneg %p396
    // Predicated region
    $region49: #{fourier_unit_forward.1} parent=5 // pred_check
      _
    $region50: #{fourier_unit_forward.1} parent=5 // pred_check_branch
      %399 = sbr.rel (%p396) target = $region52
    $region51: #{fourier_unit_forward.1} parent=5 // pred_region
      %s400 = ssub.s32 %s16, 1
      %s401 = smul.u32 2, %s28
      %p402 = scmp.lt.s32.totalorder %s26, 1
      %s403 = scalar_select %p402, %s26, 1
      %p404 = scmp.lt.s32.totalorder %s401, 1
      %s405 = scalar_select %p404, %s401, 1
      %s406 = smul.addr %s403, 2
      %s407 = sadd.s32 %s405, %s406
      %s408 = smul.addr %s407, 2
      %s409 = scalar_lea.vmem %s0, %s408
      %p410 = pneg %p63
      %p411 = pneg %p60
      %s412 = smul.u32 2, %s28
      %p413 = scmp.lt.s32.totalorder %s26, 1
      %s414 = scalar_select %p413, %s26, 1
      %p415 = scmp.lt.s32.totalorder %s412, 1
      %s416 = scalar_select %p415, %s412, 1
      %s417 = smul.addr %s414, 2
      %s418 = sadd.s32 %s416, %s417
      %s419 = smul.addr %s418, 2
      %s420 = scalar_lea.vmem %s1, %s419
      %p421 = pneg %p91
      %p422 = pneg %p88
      %p423 = scmp.lt.s32.totalorder %s27, 0
      %s424 = scalar_select %p423, %s27, 0
      %s425 = smul.addr %s424, 2
      %s426 = scalar_lea.vmem %s2, %s425
      %p427 = pneg %p117
      %p428 = pneg %p114
      %p429 = scmp.lt.s32.totalorder %s27, 0
      %s430 = scalar_select %p429, %s27, 0
      %s431 = smul.addr %s430, 2
      %s432 = scalar_lea.vmem %s3, %s431
      %p433 = pneg %p143
      %p434 = pneg %p140
      %p435 = scmp.lt.s32.totalorder %s27, 0
      %s436 = scalar_select %p435, %s27, 0
      %s437 = smul.addr %s436, 2
      %s438 = scalar_lea.vmem %s4, %s437
      %p439 = pneg %p169
      %p440 = pneg %p166
      %p441 = scmp.lt.s32.totalorder %s27, 0
      %s442 = scalar_select %p441, %s27, 0
      %s443 = smul.addr %s442, 2
      %s444 = scalar_lea.vmem %s5, %s443
      %p445 = pneg %p195
      %p446 = pneg %p192
      %p447 = scmp.lt.s32.totalorder %s27, 0
      %s448 = scalar_select %p447, %s27, 0
      %s449 = smul.addr %s448, 4
      %s450 = scalar_lea.vmem %s6, %s449
      %p451 = pneg %p221
      %p452 = pneg %p218
      %p453 = scmp.lt.s32.totalorder %s27, 0
      %s454 = scalar_select %p453, %s27, 0
      %s455 = smul.addr %s454, 4
      %s456 = scalar_lea.vmem %s7, %s455
      %p457 = pneg %p247
      %p458 = pneg %p244
      %p459 = pneg %p277
      %p460 = pneg %p274
      %s461 = smul.u32 2, %s28
      %p462 = scmp.lt.s32.totalorder %s26, 1
      %s463 = scalar_select %p462, %s26, 1
      %p464 = scmp.lt.s32.totalorder %s27, 0
      %s465 = scalar_select %p464, %s27, 0
      %p466 = scmp.lt.s32.totalorder %s461, 1
      %s467 = scalar_select %p466, %s461, 1
      %s468 = smul.addr %s465, 2
      %s469 = sadd.s32 %s467, %s468
      %s470 = smul.addr %s463, 2
      %s471 = sadd.s32 %s469, %s470
      %s472 = smul.addr %s471, 4
      %s473 = scalar_lea.vmem %s8, %s472
      %p474 = pneg %p307
      %p475 = pneg %p304
      %s476 = smul.u32 2, %s28
      %p477 = scmp.lt.s32.totalorder %s26, 1
      %s478 = scalar_select %p477, %s26, 1
      %p479 = scmp.lt.s32.totalorder %s27, 0
      %s480 = scalar_select %p479, %s27, 0
      %p481 = scmp.lt.s32.totalorder %s476, 1
      %s482 = scalar_select %p481, %s476, 1
      %s483 = smul.addr %s480, 2
      %s484 = sadd.s32 %s482, %s483
      %s485 = smul.addr %s478, 2
      %s486 = sadd.s32 %s484, %s485
      %s487 = smul.addr %s486, 4
      %s488 = scalar_lea.vmem %s9, %s487
      %s489 = smul.u32 2, %s28
      %p490 = scmp.lt.s32.totalorder %s26, 1
      %s491 = scalar_select %p490, %s26, 1
      %p492 = scmp.lt.s32.totalorder %s489, 1
      %s493 = scalar_select %p492, %s489, 1
      %s494 = smul.addr %s491, 2
      %s495 = sadd.s32 %s493, %s494
      %s496 = smul.addr %s495, 2
      %s497 = scalar_lea.vmem %s0, %s496
      %s498 = smul.u32 2, %s28
      %s499 = smul.u32 2, %s28
      %p500 = scmp.lt.s32.totalorder %s26, 1
      %s501 = scalar_select %p500, %s26, 1
      %p502 = scmp.lt.s32.totalorder %s499, 1
      %s503 = scalar_select %p502, %s499, 1
      %s504 = smul.addr %s501, 2
      %s505 = sadd.s32 %s503, %s504
      %s506 = smul.addr %s505, 2
      %s507 = scalar_lea.vmem %s1, %s506
      %s508 = smul.u32 2, %s28
      %p509 = scmp.lt.s32.totalorder %s27, 0
      %s510 = scalar_select %p509, %s27, 0
      %s511 = smul.addr %s510, 2
      %s512 = scalar_lea.vmem %s2, %s511
      %p513 = scmp.lt.s32.totalorder %s27, 0
      %s514 = scalar_select %p513, %s27, 0
      %s515 = smul.addr %s514, 2
      %s516 = scalar_lea.vmem %s3, %s515
      %p517 = scmp.lt.s32.totalorder %s27, 0
      %s518 = scalar_select %p517, %s27, 0
      %s519 = smul.addr %s518, 2
      %s520 = scalar_lea.vmem %s4, %s519
      %p521 = scmp.lt.s32.totalorder %s27, 0
      %s522 = scalar_select %p521, %s27, 0
      %s523 = smul.addr %s522, 2
      %s524 = scalar_lea.vmem %s5, %s523
      %p525 = scmp.lt.s32.totalorder %s27, 0
      %s526 = scalar_select %p525, %s27, 0
      %s527 = smul.addr %s526, 4
      %s528 = scalar_lea.vmem %s6, %s527
      %p529 = scmp.lt.s32.totalorder %s27, 0
      %s530 = scalar_select %p529, %s27, 0
      %s531 = smul.addr %s530, 4
      %s532 = scalar_lea.vmem %s7, %s531
      %s533 = smul.u32 2, %s28
      %p534 = scmp.lt.s32.totalorder %s26, 1
      %s535 = scalar_select %p534, %s26, 1
      %p536 = scmp.lt.s32.totalorder %s27, 0
      %s537 = scalar_select %p536, %s27, 0
      %p538 = scmp.lt.s32.totalorder %s533, 1
      %s539 = scalar_select %p538, %s533, 1
      %s540 = smul.addr %s537, 2
      %s541 = sadd.s32 %s539, %s540
      %s542 = smul.addr %s535, 2
      %s543 = sadd.s32 %s541, %s542
      %s544 = smul.addr %s543, 4
      %s545 = scalar_lea.vmem %s8, %s544
      %s546 = smul.u32 2, %s28
      %s547 = smul.u32 2, %s28
      %p548 = scmp.lt.s32.totalorder %s26, 1
      %s549 = scalar_select %p548, %s26, 1
      %p550 = scmp.lt.s32.totalorder %s27, 0
      %s551 = scalar_select %p550, %s27, 0
      %p552 = scmp.lt.s32.totalorder %s547, 1
      %s553 = scalar_select %p552, %s547, 1
      %s554 = smul.addr %s551, 2
      %s555 = sadd.s32 %s553, %s554
      %s556 = smul.addr %s549, 2
      %s557 = sadd.s32 %s555, %s556
      %s558 = smul.addr %s557, 4
      %s559 = scalar_lea.vmem %s9, %s558
      %s560 = smul.u32 2, %s28
      %v562 = vld [vmem:[%s497] sm:$0xf]
      %v563 = vld [vmem:[%s507] sm:$0xf]
      %v564 = vld [vmem:[%s512] sm:$0x3]
      %v565 = vld [vmem:[%s516] sm:$0x3]
      %v568 = vunpack.c.l.s4 1983009808
      %v569 = vunpack.c.0.s8 %v568
      %v570 = vlaneseq
      %v571 = vshrl.u32 %v570, 7
      %v572 = vsub.s32 %v569, %v571
      %v573 = vrot.slane %v563, %v572
      %v574 = vcombine.high %v573, %v573
      %vm575 = vcmask 31744
      %v577 = vsel %vm575, %v565, 0
      %vm579 = vcmask 1041408
      %v581 = vsel %vm579, %v573, 0
      %v584 = vsel %vm579, %v574, 0
      %586 = vmatprep.subr.bf16.mxu0 %v584
      %587 = vmatpush1.bf16.msra.mxu0 %v581
      %588 = vmatprep.subr.bf16.mxu0 0
      %589 = vmatpush1.bf16.msra.mxu0 0
      %590 = vmatprep.subr.bf16.mxu0 0
      %591 = vmatpush1.bf16.msra.mxu0 0
      %592 = vmatprep.subr.bf16.mxu0 0
      %593 = vmatpush1.bf16.msra.mxu0 0
      %594 = vmatprep.subr.bf16.mxu0 0
      %595 = vmatpush1.bf16.msra.mxu0 0
      %596 = vmatprep.subr.bf16.mxu0 0
      %597 = vmatpush1.bf16.msra.mxu0 0
      %598 = vmatprep.subr.bf16.mxu0 0
      %599 = vmatpush1.bf16.msra.mxu0 0
      %600 = vmatprep.subr.bf16.mxu0 0
      %601 = vmatpush1.bf16.msra.mxu0 0
      %602 = vmatprep.subr.bf16.mxu0 0
      %603 = vmatpush1.bf16.msra.mxu0 0
      %604 = vmatprep.subr.bf16.mxu0 0
      %605 = vmatpush1.bf16.msra.mxu0 0
      %606 = vmatprep.subr.bf16.mxu0 0
      %607 = vmatpush1.bf16.msra.mxu0 0
      %608 = vmatprep.subr.bf16.mxu0 0
      %609 = vmatpush1.bf16.msra.mxu0 0
      %610 = vmatprep.subr.bf16.mxu0 0
      %611 = vmatpush1.bf16.msra.mxu0 0
      %612 = vmatprep.subr.bf16.mxu0 0
      %613 = vmatpush1.bf16.msra.mxu0 0
      %614 = vmatprep.subr.bf16.mxu0 0
      %615 = vmatpush1.bf16.msra.mxu0 0
      %616 = vmatprep.subr.bf16.mxu0 0
      %617 = vmatpush1.bf16.msra.mxu0 0
      %618 = vmatprep.mubr.bf16.mxu0 0
      %619 = vmatmul.mubr.bf16.gmra.mrb[0].mxu0 %v577
      %v620 = vpop.f32.mrb[0].mxu0
      %v621 = vadd.f32 0.0, %v620
      %v622 = vpop.f32.mrb[0].mxu0
      %v623 = vadd.f32 0.0, %v622
      %v624 = vpop.f32.mrb[0].mxu0
      %v625 = vpop.f32.mrb[0].mxu0
      %626 = vdwg.mxu0
      %v629 = vunpack.c.l.s4 1983009808
      %v630 = vunpack.c.0.s8 %v629
      %v631 = vlaneseq
      %v632 = vshrl.u32 %v631, 7
      %v633 = vsub.s32 %v630, %v632
      %v634 = vrot.slane %v562, %v633
      %v635 = vcombine.high %v634, %v634
      %v637 = vsel %vm575, %v564, 0
      %v640 = vsel %vm579, %v634, 0
      %v643 = vsel %vm579, %v635, 0
      %645 = vmatprep.subr.bf16.mxu0 %v643
      %646 = vmatpush1.bf16.msra.mxu0 %v640
      %647 = vmatprep.subr.bf16.mxu0 0
      %648 = vmatpush1.bf16.msra.mxu0 0
      %649 = vmatprep.subr.bf16.mxu0 0
      %650 = vmatpush1.bf16.msra.mxu0 0
      %651 = vmatprep.subr.bf16.mxu0 0
      %652 = vmatpush1.bf16.msra.mxu0 0
      %653 = vmatprep.subr.bf16.mxu0 0
      %654 = vmatpush1.bf16.msra.mxu0 0
      %655 = vmatprep.subr.bf16.mxu0 0
      %656 = vmatpush1.bf16.msra.mxu0 0
      %657 = vmatprep.subr.bf16.mxu0 0
      %658 = vmatpush1.bf16.msra.mxu0 0
      %659 = vmatprep.subr.bf16.mxu0 0
      %660 = vmatpush1.bf16.msra.mxu0 0
      %661 = vmatprep.subr.bf16.mxu0 0
      %662 = vmatpush1.bf16.msra.mxu0 0
      %663 = vmatprep.subr.bf16.mxu0 0
      %664 = vmatpush1.bf16.msra.mxu0 0
      %665 = vmatprep.subr.bf16.mxu0 0
      %666 = vmatpush1.bf16.msra.mxu0 0
      %667 = vmatprep.subr.bf16.mxu0 0
      %668 = vmatpush1.bf16.msra.mxu0 0
      %669 = vmatprep.subr.bf16.mxu0 0
      %670 = vmatpush1.bf16.msra.mxu0 0
      %671 = vmatprep.subr.bf16.mxu0 0
      %672 = vmatpush1.bf16.msra.mxu0 0
      %673 = vmatprep.subr.bf16.mxu0 0
      %674 = vmatpush1.bf16.msra.mxu0 0
      %675 = vmatprep.subr.bf16.mxu0 0
      %676 = vmatpush1.bf16.msra.mxu0 0
      %677 = vmatprep.mubr.bf16.mxu0 0
      %678 = vmatmul.mubr.bf16.gmra.mrb[0].mxu0 %v637
      %v679 = vpop.f32.mrb[0].mxu0
      %v680 = vadd.f32 %v621, %v679
      %v681 = vpop.f32.mrb[0].mxu0
      %v682 = vadd.f32 %v623, %v681
      %v683 = vpop.f32.mrb[0].mxu0
      %v684 = vpop.f32.mrb[0].mxu0
      %685 = vdwg.mxu0
      %v686 = vld [vmem:[%s520] sm:$0x3]
      %v687 = vld [vmem:[%s524] sm:$0x3]
      %v689 = vsel %vm575, %v687, 0
      %691 = vmatprep.subr.bf16.mxu0 %v584
      %692 = vmatpush1.bf16.msra.mxu0 %v581
      %693 = vmatprep.subr.bf16.mxu0 0
      %694 = vmatpush1.bf16.msra.mxu0 0
      %695 = vmatprep.subr.bf16.mxu0 0
      %696 = vmatpush1.bf16.msra.mxu0 0
      %697 = vmatprep.subr.bf16.mxu0 0
      %698 = vmatpush1.bf16.msra.mxu0 0
      %699 = vmatprep.subr.bf16.mxu0 0
      %700 = vmatpush1.bf16.msra.mxu0 0
      %701 = vmatprep.subr.bf16.mxu0 0
      %702 = vmatpush1.bf16.msra.mxu0 0
      %703 = vmatprep.subr.bf16.mxu0 0
      %704 = vmatpush1.bf16.msra.mxu0 0
      %705 = vmatprep.subr.bf16.mxu0 0
      %706 = vmatpush1.bf16.msra.mxu0 0
      %707 = vmatprep.subr.bf16.mxu0 0
      %708 = vmatpush1.bf16.msra.mxu0 0
      %709 = vmatprep.subr.bf16.mxu0 0
      %710 = vmatpush1.bf16.msra.mxu0 0
      %711 = vmatprep.subr.bf16.mxu0 0
      %712 = vmatpush1.bf16.msra.mxu0 0
      %713 = vmatprep.subr.bf16.mxu0 0
      %714 = vmatpush1.bf16.msra.mxu0 0
      %715 = vmatprep.subr.bf16.mxu0 0
      %716 = vmatpush1.bf16.msra.mxu0 0
      %717 = vmatprep.subr.bf16.mxu0 0
      %718 = vmatpush1.bf16.msra.mxu0 0
      %719 = vmatprep.subr.bf16.mxu0 0
      %720 = vmatpush1.bf16.msra.mxu0 0
      %721 = vmatprep.subr.bf16.mxu0 0
      %722 = vmatpush1.bf16.msra.mxu0 0
      %723 = vmatprep.mubr.bf16.mxu0 0
      %724 = vmatmul.mubr.bf16.gmra.mrb[0].mxu0 %v689
      %v725 = vpop.f32.mrb[0].mxu0
      %v726 = vadd.f32 0.0, %v725
      %v727 = vpop.f32.mrb[0].mxu0
      %v728 = vadd.f32 0.0, %v727
      %v729 = vpop.f32.mrb[0].mxu0
      %v730 = vpop.f32.mrb[0].mxu0
      %731 = vdwg.mxu0
      %v733 = vsel %vm575, %v686, 0
      %735 = vmatprep.subr.bf16.mxu0 %v643
      %736 = vmatpush1.bf16.msra.mxu0 %v640
      %737 = vmatprep.subr.bf16.mxu0 0
      %738 = vmatpush1.bf16.msra.mxu0 0
      %739 = vmatprep.subr.bf16.mxu0 0
      %740 = vmatpush1.bf16.msra.mxu0 0
      %741 = vmatprep.subr.bf16.mxu0 0
      %742 = vmatpush1.bf16.msra.mxu0 0
      %743 = vmatprep.subr.bf16.mxu0 0
      %744 = vmatpush1.bf16.msra.mxu0 0
      %745 = vmatprep.subr.bf16.mxu0 0
      %746 = vmatpush1.bf16.msra.mxu0 0
      %747 = vmatprep.subr.bf16.mxu0 0
      %748 = vmatpush1.bf16.msra.mxu0 0
      %749 = vmatprep.subr.bf16.mxu0 0
      %750 = vmatpush1.bf16.msra.mxu0 0
      %751 = vmatprep.subr.bf16.mxu0 0
      %752 = vmatpush1.bf16.msra.mxu0 0
      %753 = vmatprep.subr.bf16.mxu0 0
      %754 = vmatpush1.bf16.msra.mxu0 0
      %755 = vmatprep.subr.bf16.mxu0 0
      %756 = vmatpush1.bf16.msra.mxu0 0
      %757 = vmatprep.subr.bf16.mxu0 0
      %758 = vmatpush1.bf16.msra.mxu0 0
      %759 = vmatprep.subr.bf16.mxu0 0
      %760 = vmatpush1.bf16.msra.mxu0 0
      %761 = vmatprep.subr.bf16.mxu0 0
      %762 = vmatpush1.bf16.msra.mxu0 0
      %763 = vmatprep.subr.bf16.mxu0 0
      %764 = vmatpush1.bf16.msra.mxu0 0
      %765 = vmatprep.subr.bf16.mxu0 0
      %766 = vmatpush1.bf16.msra.mxu0 0
      %767 = vmatprep.mubr.bf16.mxu0 0
      %768 = vmatmul.mubr.bf16.gmra.mrb[0].mxu0 %v733
      %v769 = vpop.f32.mrb[0].mxu0
      %v770 = vadd.f32 %v726, %v769
      %v771 = vpop.f32.mrb[0].mxu0
      %v772 = vadd.f32 %v728, %v771
      %v773 = vpop.f32.mrb[0].mxu0
      %v774 = vpop.f32.mrb[0].mxu0
      %775 = vdwg.mxu0
      %v776 = vld [vmem:[%s528] sm:$0xf]
      %778 = vset.pattern.permute.xlu0 0
      %779 = vperm.xlu0 %778, %v776
      %v780 = vpop.permute.xlu0 %779
      %v782 = vadd.f32 %v680, %v780
      %v783 = vadd.f32 %v682, %v780
      %v784 = vmax.f32 %v782, 0.0
      %v785 = vmax.f32 %v783, 0.0
      %v788 = vcombine.low %v784, %v785
      %790 = vst [vmem:[%s545] sm:$0xff] %v788
      %v791 = vld [vmem:[%s532] sm:$0xf]
      %793 = vset.pattern.permute.xlu0 0
      %794 = vperm.xlu0 %793, %v791
      %v795 = vpop.permute.xlu0 %794
      %v797 = vadd.f32 %v770, %v795
      %v798 = vadd.f32 %v772, %v795
      %v799 = vmax.f32 %v797, 0.0
      %v800 = vmax.f32 %v798, 0.0
      %v803 = vcombine.low %v799, %v800
      %805 = vst [vmem:[%s559] sm:$0xff] %v803
      %s806 = smul.u32 2, %s28
      %p807 = scmp.lt.s32.totalorder %s26, 1
      %s808 = scalar_select %p807, %s26, 1
      %p809 = scmp.lt.s32.totalorder %s27, 0
      %s810 = scalar_select %p809, %s27, 0
      %p811 = scmp.lt.s32.totalorder %s806, 1
      %s812 = scalar_select %p811, %s806, 1
      %s813 = smul.addr %s810, 2
      %s814 = sadd.s32 %s812, %s813
      %s815 = smul.addr %s808, 2
      %s816 = sadd.s32 %s814, %s815
      %s817 = smul.addr %s816, 4
      %s818 = scalar_lea.vmem %s8, %s817
      %s819 = smul.u32 2, %s28
      %p820 = scmp.lt.s32.totalorder %s26, 1
      %s821 = scalar_select %p820, %s26, 1
      %p822 = scmp.lt.s32.totalorder %s27, 0
      %s823 = scalar_select %p822, %s27, 0
      %p824 = scmp.lt.s32.totalorder %s819, 1
      %s825 = scalar_select %p824, %s819, 1
      %s826 = smul.addr %s823, 2
      %s827 = sadd.s32 %s825, %s826
      %s828 = smul.addr %s821, 2
      %s829 = sadd.s32 %s827, %s828
      %s830 = smul.addr %s829, 4
      %s831 = scalar_lea.vmem %s9, %s830
      // Predicated region
      $region53: #{fourier_unit_forward.1} parent=51 // pred_check
        %p832 = pneg %p274
      $region54: #{fourier_unit_forward.1} parent=51 // pred_check_branch
        %834 = sbr.rel (%p832) target = $region56
      $region55: #{fourier_unit_forward.1} parent=51 // pred_region
        %s835 = smul.u32 2, %s28
      $region56: #{fourier_unit_forward.1} parent=51 // pred_fallthru
        _
      // Predicated region
      $region57: #{fourier_unit_forward.1} parent=51 // pred_check
        %p836 = pneg %p304
      $region58: #{fourier_unit_forward.1} parent=51 // pred_check_branch
        %838 = sbr.rel (%p836) target = $region60
      $region59: #{fourier_unit_forward.1} parent=51 // pred_region
        %s839 = smul.u32 2, %s28
      $region60: #{fourier_unit_forward.1} parent=51 // pred_fallthru
        _
    $region52: #{fourier_unit_forward.1} parent=5 // pred_fallthru
      _
    %p840 = scmp.le.s32.totalorder 2, %s16
    // Predicated region
    $region61: #{fourier_unit_forward.1} parent=5 // pred_check
      %p841 = pneg %p840
    $region62: #{fourier_unit_forward.1} parent=5 // pred_check_branch
      %843 = sbr.rel (%p841) target = $region64
    $region63: #{fourier_unit_forward.1} parent=5 // pred_region
      %s844 = ssub.s32 %s16, 2
      // Predicated region
      $region65: #{fourier_unit_forward.1} parent=63 // pred_check
        %p845 = pneg %p280
      $region66: #{fourier_unit_forward.1} parent=63 // pred_check_branch
        %847 = sbr.rel (%p845) target = $region68
      $region67: #{fourier_unit_forward.1} parent=63 // pred_region
        %s848 = smul.u32 2, %s31
        %p849 = scmp.lt.s32.totalorder %s29, 1
        %s850 = scalar_select %p849, %s29, 1
        %p851 = scmp.lt.s32.totalorder %s30, 0
        %s852 = scalar_select %p851, %s30, 0
        %p853 = scmp.lt.s32.totalorder %s848, 1
        %s854 = scalar_select %p853, %s848, 1
        %s855 = smul.addr %s852, 2
        %s856 = sadd.s32 %s854, %s855
        %s857 = smul.addr %s850, 2
        %s858 = sadd.s32 %s856, %s857
        %s859 = smul.addr %s858, 4
        %s860 = scalar_lea.vmem %s8, %s859
      $region68: #{fourier_unit_forward.1} parent=63 // pred_fallthru
        _
      // Predicated region
      $region69: #{fourier_unit_forward.1} parent=63 // pred_check
        %p861 = pneg %p310
      $region70: #{fourier_unit_forward.1} parent=63 // pred_check_branch
        %863 = sbr.rel (%p861) target = $region72
      $region71: #{fourier_unit_forward.1} parent=63 // pred_region
        %s864 = smul.u32 2, %s31
        %p865 = scmp.lt.s32.totalorder %s29, 1
        %s866 = scalar_select %p865, %s29, 1
        %p867 = scmp.lt.s32.totalorder %s30, 0
        %s868 = scalar_select %p867, %s30, 0
        %p869 = scmp.lt.s32.totalorder %s864, 1
        %s870 = scalar_select %p869, %s864, 1
        %s871 = smul.addr %s868, 2
        %s872 = sadd.s32 %s870, %s871
        %s873 = smul.addr %s866, 2
        %s874 = sadd.s32 %s872, %s873
        %s875 = smul.addr %s874, 4
        %s876 = scalar_lea.vmem %s9, %s875
      $region72: #{fourier_unit_forward.1} parent=63 // pred_fallthru
        _
    $region64: #{fourier_unit_forward.1} parent=5 // pred_fallthru
      _
  $region6: #{fourier_unit_forward.1} parent=0 // loop_footer
    %s20 = sadd.s32 1, %s16
  $region7: #{fourier_unit_forward.1} parent=0 // loop_footer_branch
    %15 = sbr.rel target = $region3
  $region8: #{fourier_unit_forward.1} parent=0 // loop_exit
    _

</llo_original>
